<compile_context>
chip_gen: v7x
topology: tpu7x:2x2x1
jax: 0.10.0
libtpu: 0.0.40
codegen_flags: <defaults>
</compile_context>

<pallas_src>
import functools

import jax
import jax.numpy as jnp
from jax.experimental import pallas as pl
from jax.experimental.pallas import tpu as pltpu


def _round_up(n, m):
    return ((n + m - 1) // m) * m


def ffnn_kernel(x_ref, w1_ref, b1_ref, w2_ref, b2_ref,
                w3_ref, b3_ref, w4_ref, b4_ref, o_ref):
    # Layer 1: bf16 operands on the MXU, f32 accumulate; bias + ReLU in f32.
    h = jnp.dot(x_ref[...].astype(jnp.bfloat16), w1_ref[...],
                preferred_element_type=jnp.float32)
    h = jnp.maximum(h + b1_ref[...], 0.0)
    # Layer 2
    h = jnp.dot(h.astype(jnp.bfloat16), w2_ref[...],
                preferred_element_type=jnp.float32)
    h = jnp.maximum(h + b2_ref[...], 0.0)
    # Layer 3
    h = jnp.dot(h.astype(jnp.bfloat16), w3_ref[...],
                preferred_element_type=jnp.float32)
    h = jnp.maximum(h + b3_ref[...], 0.0)
    # Layer 4: Linear only (nn.Sequential has no trailing ReLU).
    o = jnp.dot(h.astype(jnp.bfloat16), w4_ref[...],
                preferred_element_type=jnp.float32)
    o_ref[...] = o + b4_ref[...]


def prepare_params(params):
    """One-time formatting: W -> bf16 (in, out), b -> f32 (1, out).

    Do this once outside the hot path so no per-call cast/reshape launches.
    """
    prepared = []
    for w, b in params:
        prepared.append((jnp.asarray(w, jnp.float32).astype(jnp.bfloat16),
                         jnp.asarray(b, jnp.float32).reshape(1, -1)))
    return prepared


@functools.partial(jax.jit, static_argnames=("tm",))
def ffnn_forward(x, prepared_params, tm=2048):
    """x: (batch, in_dim) f32. prepared_params: output of prepare_params().

    Returns f32 (batch, out_dim).
    """
    batch, in_dim = x.shape
    out_dim = prepared_params[-1][0].shape[1]

    # Rows must be 8-aligned for the (8, 128) sublane constraint; only the
    # (rare) non-multiple-of-8 batch pays a pad pass.
    batch8 = _round_up(batch, 8)
    if batch8 != batch:
        x = jnp.pad(x, ((0, batch8 - batch), (0, 0)))

    # Row tile: as large as `tm`, but keep >= 2 grid steps whenever the batch
    # can be split, so v7x's two TensorCores both get work via the
    # ("parallel",) batch axis.  On single-TC v5e/v6e the extra step costs
    # only ~0.35 us and is hidden by double-buffering.
    tm_eff = min(tm, batch8)
    if batch8 // tm_eff < 2 and batch8 >= 16:
        tm_eff = _round_up(pl.cdiv(batch8, 2), 8)
    grid = (pl.cdiv(batch8, tm_eff),)

    flat_args = []
    in_specs = [pl.BlockSpec((tm_eff, in_dim), lambda i: (i, 0))]
    flops = 0
    bytes_accessed = batch8 * in_dim * 4            # f32 x stream
    for w, b in prepared_params:
        flat_args.extend([w, b])
        # Constant index_map -> weights/biases VMEM-resident across all tiles.
        in_specs.append(pl.BlockSpec(w.shape, lambda i: (0, 0)))
        in_specs.append(pl.BlockSpec(b.shape, lambda i: (0, 0)))
        flops += 2 * batch8 * w.shape[0] * w.shape[1]
        bytes_accessed += w.shape[0] * w.shape[1] * 2 + b.shape[1] * 4
    bytes_accessed += batch8 * out_dim * 4          # f32 output stream

    out = pl.pallas_call(
        ffnn_kernel,
        out_shape=jax.ShapeDtypeStruct((batch8, out_dim), jnp.float32),
        grid=grid,
        in_specs=in_specs,
        out_specs=pl.BlockSpec((tm_eff, out_dim), lambda i: (i, 0)),
        compiler_params=pltpu.CompilerParams(
            dimension_semantics=("parallel",)),
        cost_estimate=pl.CostEstimate(flops=flops, transcendentals=0,
                                      bytes_accessed=bytes_accessed),
    )(x, *flat_args)
    if batch8 != batch:
        out = out[:batch]
    return out


def init_linear(key, in_dim, out_dim):
    """Deterministic init mirroring PyTorch nn.Linear default (uniform +/- 1/sqrt(in))."""
    kw, kb = jax.random.split(key)
    bound = 1.0 / jnp.sqrt(jnp.float32(in_dim))
    # Stored directly as (in, out) so the kernel computes x @ W (== x @ W_pt.T + b).
    w = jax.random.uniform(kw, (in_dim, out_dim), jnp.float32, -bound, bound)
    b = jax.random.uniform(kb, (1, out_dim), jnp.float32, -bound, bound)
    return w, b


def ffnn_reference(x, params):
    h = x.astype(jnp.float32)
    for i, (w, b) in enumerate(params):
        h = h @ w + b
        if i < len(params) - 1:
            h = jnp.maximum(h, 0.0)
    return h


if __name__ == "__main__":
    # Module config: FFNN(input_dim=32, output_dim=16, hidden_dim=[64, 64, 32])
    input_dim, output_dim = 32, 16
    hidden_dim = [64, 64, 32]
    batch = 8

    key = jax.random.PRNGKey(0)
    k_x, k_big, k1, k2, k3, k4 = jax.random.split(key, 6)

    dims = [input_dim] + hidden_dim + [output_dim]
    keys = [k1, k2, k3, k4]
    params = [init_linear(k, dims[i], dims[i + 1]) for i, k in enumerate(keys)]
    pparams = prepare_params(params)     # one-time bf16/reshape, outside hot path

    # Small-batch check (single tile, grid=(1,)).
    x = jax.random.normal(k_x, (batch, input_dim), jnp.float32)
    y = jax.block_until_ready(ffnn_forward(x, pparams))
    y_ref = ffnn_reference(x, params)
    assert y.shape == (batch, output_dim)
    # bf16 operands -> looser tolerance vs. the f32 reference.
    assert jnp.allclose(y, y_ref, atol=5e-2, rtol=5e-2), "mismatch vs reference (small batch)"

    # Larger batch exercises the pipelined, megacore-shardable grid (grid=(2,)).
    xb = jax.random.normal(k_big, (1024, input_dim), jnp.float32)
    yb = jax.block_until_ready(ffnn_forward(xb, pparams))
    yb_ref = ffnn_reference(xb, params)
    assert yb.shape == (1024, output_dim)
    assert jnp.allclose(yb, yb_ref, atol=5e-2, rtol=5e-2), "mismatch vs reference (large batch)"

    # TODO(synk): `predict` in the PyTorch module constructs nn.Softmax(y)
    # incorrectly (instantiates the module with a tensor, never applies it);
    # only forward() is implemented here.
    print("KERNEL_OK")
</pallas_src>

<mosaic_0001>
module attributes {stable_mosaic.version = 11 : i64} {
  func.func @ffnn_kernel(%arg0: i32, %arg1: memref<8x32xf32, #tpu.memory_space<vmem>>, %arg2: memref<32x64xbf16, #tpu.memory_space<vmem>>, %arg3: memref<1x64xf32, #tpu.memory_space<vmem>>, %arg4: memref<64x64xbf16, #tpu.memory_space<vmem>>, %arg5: memref<1x64xf32, #tpu.memory_space<vmem>>, %arg6: memref<64x32xbf16, #tpu.memory_space<vmem>>, %arg7: memref<1x32xf32, #tpu.memory_space<vmem>>, %arg8: memref<32x16xbf16, #tpu.memory_space<vmem>>, %arg9: memref<1x16xf32, #tpu.memory_space<vmem>>, %arg10: memref<8x16xf32, #tpu.memory_space<vmem>>) attributes {dimension_semantics = [#tpu.dimension_semantics<parallel>], iteration_bounds = array<i64: 1>, scalar_prefetch = 0 : i64, scratch_operands = 0 : i64, tpu.core_type = #tpu.core_type<tc>, window_params = [{transform_indices = @transform_0, window_bounds = array<i64: 8, 32>}, {pipeline_mode = #tpu.pipeline_mode<synchronous>, transform_indices = @transform_1, window_bounds = array<i64: 32, 64>}, {pipeline_mode = #tpu.pipeline_mode<synchronous>, transform_indices = @transform_2, window_bounds = array<i64: 1, 64>}, {pipeline_mode = #tpu.pipeline_mode<synchronous>, transform_indices = @transform_3, window_bounds = array<i64: 64, 64>}, {pipeline_mode = #tpu.pipeline_mode<synchronous>, transform_indices = @transform_4, window_bounds = array<i64: 1, 64>}, {pipeline_mode = #tpu.pipeline_mode<synchronous>, transform_indices = @transform_5, window_bounds = array<i64: 64, 32>}, {pipeline_mode = #tpu.pipeline_mode<synchronous>, transform_indices = @transform_6, window_bounds = array<i64: 1, 32>}, {pipeline_mode = #tpu.pipeline_mode<synchronous>, transform_indices = @transform_7, window_bounds = array<i64: 32, 16>}, {pipeline_mode = #tpu.pipeline_mode<synchronous>, transform_indices = @transform_8, window_bounds = array<i64: 1, 16>}, {transform_indices = @transform_9, window_bounds = array<i64: 8, 16>}]} {
    %c0 = arith.constant 0 : index
    %c0_0 = arith.constant 0 : index
    %0 = vector.load %arg1[%c0, %c0_0] : memref<8x32xf32, #tpu.memory_space<vmem>>, vector<8x32xf32>
    %1 = arith.truncf %0 : vector<8x32xf32> to vector<8x32xbf16>
    %c0_1 = arith.constant 0 : index
    %c0_2 = arith.constant 0 : index
    %2 = vector.load %arg2[%c0_1, %c0_2] : memref<32x64xbf16, #tpu.memory_space<vmem>>, vector<32x64xbf16>
    %cst = arith.constant dense<0.000000e+00> : vector<8x64xf32>
    %3 = tpu.matmul %1, %2, %cst {dimension_numbers = #tpu.dot_dimension_numbers<[1], [0], [0], [1], [0, 0, 1, 1], [], []>} : vector<8x32xbf16>, vector<32x64xbf16>, vector<8x64xf32> -> vector<8x64xf32>
    %c0_3 = arith.constant 0 : index
    %c0_4 = arith.constant 0 : index
    %4 = vector.load %arg3[%c0_3, %c0_4] : memref<1x64xf32, #tpu.memory_space<vmem>>, vector<1x64xf32>
    %5 = vector.broadcast %4 : vector<1x64xf32> to vector<8x64xf32>
    %6 = arith.addf %3, %5 : vector<8x64xf32>
    %cst_5 = arith.constant 0.000000e+00 : f32
    %7 = vector.broadcast %cst_5 : f32 to vector<8x64xf32>
    %8 = arith.maximumf %6, %7 : vector<8x64xf32>
    %9 = arith.truncf %8 : vector<8x64xf32> to vector<8x64xbf16>
    %c0_6 = arith.constant 0 : index
    %c0_7 = arith.constant 0 : index
    %10 = vector.load %arg4[%c0_6, %c0_7] : memref<64x64xbf16, #tpu.memory_space<vmem>>, vector<64x64xbf16>
    %cst_8 = arith.constant dense<0.000000e+00> : vector<8x64xf32>
    %11 = tpu.matmul %9, %10, %cst_8 {dimension_numbers = #tpu.dot_dimension_numbers<[1], [0], [0], [1], [0, 0, 1, 1], [], []>} : vector<8x64xbf16>, vector<64x64xbf16>, vector<8x64xf32> -> vector<8x64xf32>
    %c0_9 = arith.constant 0 : index
    %c0_10 = arith.constant 0 : index
    %12 = vector.load %arg5[%c0_9, %c0_10] : memref<1x64xf32, #tpu.memory_space<vmem>>, vector<1x64xf32>
    %13 = vector.broadcast %12 : vector<1x64xf32> to vector<8x64xf32>
    %14 = arith.addf %11, %13 : vector<8x64xf32>
    %cst_11 = arith.constant 0.000000e+00 : f32
    %15 = vector.broadcast %cst_11 : f32 to vector<8x64xf32>
    %16 = arith.maximumf %14, %15 : vector<8x64xf32>
    %17 = arith.truncf %16 : vector<8x64xf32> to vector<8x64xbf16>
    %c0_12 = arith.constant 0 : index
    %c0_13 = arith.constant 0 : index
    %18 = vector.load %arg6[%c0_12, %c0_13] : memref<64x32xbf16, #tpu.memory_space<vmem>>, vector<64x32xbf16>
    %cst_14 = arith.constant dense<0.000000e+00> : vector<8x32xf32>
    %19 = tpu.matmul %17, %18, %cst_14 {dimension_numbers = #tpu.dot_dimension_numbers<[1], [0], [0], [1], [0, 0, 1, 1], [], []>} : vector<8x64xbf16>, vector<64x32xbf16>, vector<8x32xf32> -> vector<8x32xf32>
    %c0_15 = arith.constant 0 : index
    %c0_16 = arith.constant 0 : index
    %20 = vector.load %arg7[%c0_15, %c0_16] : memref<1x32xf32, #tpu.memory_space<vmem>>, vector<1x32xf32>
    %21 = vector.broadcast %20 : vector<1x32xf32> to vector<8x32xf32>
    %22 = arith.addf %19, %21 : vector<8x32xf32>
    %cst_17 = arith.constant 0.000000e+00 : f32
    %23 = vector.broadcast %cst_17 : f32 to vector<8x32xf32>
    %24 = arith.maximumf %22, %23 : vector<8x32xf32>
    %25 = arith.truncf %24 : vector<8x32xf32> to vector<8x32xbf16>
    %c0_18 = arith.constant 0 : index
    %c0_19 = arith.constant 0 : index
    %26 = vector.load %arg8[%c0_18, %c0_19] : memref<32x16xbf16, #tpu.memory_space<vmem>>, vector<32x16xbf16>
    %cst_20 = arith.constant dense<0.000000e+00> : vector<8x16xf32>
    %27 = tpu.matmul %25, %26, %cst_20 {dimension_numbers = #tpu.dot_dimension_numbers<[1], [0], [0], [1], [0, 0, 1, 1], [], []>} : vector<8x32xbf16>, vector<32x16xbf16>, vector<8x16xf32> -> vector<8x16xf32>
    %c0_21 = arith.constant 0 : index
    %c0_22 = arith.constant 0 : index
    %28 = vector.load %arg9[%c0_21, %c0_22] : memref<1x16xf32, #tpu.memory_space<vmem>>, vector<1x16xf32>
    %29 = vector.broadcast %28 : vector<1x16xf32> to vector<8x16xf32>
    %30 = arith.addf %27, %29 : vector<8x16xf32>
    %c0_23 = arith.constant 0 : index
    %c0_24 = arith.constant 0 : index
    %31 = vector.load %arg10[%c0_23, %c0_24] : memref<8x16xf32, #tpu.memory_space<vmem>>, vector<8x16xf32>
    tpu.vector_store %arg10[%c0_23, %c0_24], %30 {strides = array<i32>} : memref<8x16xf32, #tpu.memory_space<vmem>>, vector<8x16xf32>,
    return
  }
  func.func @transform_0(%arg0: i32) -> (i32, i32) {
    %c0_i32 = arith.constant 0 : i32
    %c0_i32_0 = arith.constant 0 : i32
    return %arg0, %c0_i32 : i32, i32
  }
  func.func @transform_1(%arg0: i32) -> (i32, i32) {
    %c0_i32 = arith.constant 0 : i32
    %c0_i32_0 = arith.constant 0 : i32
    %c0_i32_1 = arith.constant 0 : i32
    return %c0_i32, %c0_i32_0 : i32, i32
  }
  func.func @transform_2(%arg0: i32) -> (i32, i32) {
    %c0_i32 = arith.constant 0 : i32
    %c0_i32_0 = arith.constant 0 : i32
    %c0_i32_1 = arith.constant 0 : i32
    return %c0_i32, %c0_i32_0 : i32, i32
  }
  func.func @transform_3(%arg0: i32) -> (i32, i32) {
    %c0_i32 = arith.constant 0 : i32
    %c0_i32_0 = arith.constant 0 : i32
    %c0_i32_1 = arith.constant 0 : i32
    return %c0_i32, %c0_i32_0 : i32, i32
  }
  func.func @transform_4(%arg0: i32) -> (i32, i32) {
    %c0_i32 = arith.constant 0 : i32
    %c0_i32_0 = arith.constant 0 : i32
    %c0_i32_1 = arith.constant 0 : i32
    return %c0_i32, %c0_i32_0 : i32, i32
  }
  func.func @transform_5(%arg0: i32) -> (i32, i32) {
    %c0_i32 = arith.constant 0 : i32
    %c0_i32_0 = arith.constant 0 : i32
    %c0_i32_1 = arith.constant 0 : i32
    return %c0_i32, %c0_i32_0 : i32, i32
  }
  func.func @transform_6(%arg0: i32) -> (i32, i32) {
    %c0_i32 = arith.constant 0 : i32
    %c0_i32_0 = arith.constant 0 : i32
    %c0_i32_1 = arith.constant 0 : i32
    return %c0_i32, %c0_i32_0 : i32, i32
  }
  func.func @transform_7(%arg0: i32) -> (i32, i32) {
    %c0_i32 = arith.constant 0 : i32
    %c0_i32_0 = arith.constant 0 : i32
    %c0_i32_1 = arith.constant 0 : i32
    return %c0_i32, %c0_i32_0 : i32, i32
  }
  func.func @transform_8(%arg0: i32) -> (i32, i32) {
    %c0_i32 = arith.constant 0 : i32
    %c0_i32_0 = arith.constant 0 : i32
    %c0_i32_1 = arith.constant 0 : i32
    return %c0_i32, %c0_i32_0 : i32, i32
  }
  func.func @transform_9(%arg0: i32) -> (i32, i32) {
    %c0_i32 = arith.constant 0 : i32
    %c0_i32_0 = arith.constant 0 : i32
    return %arg0, %c0_i32 : i32, i32
  }
}

</mosaic_0001>

<llo_original>
// kernel: ffnn_forward.1
$region0: #{ffnn_forward.1}
  #allocation0 [shape = 'u32[]', space=smem, size = 0x4, offset = 0x4, fixed_abs, tag = 'smem constant byte address 0x4 - core index']
  #allocation1 [shape = 'u32[144,128]{1,0:T(1,128)}', space=vmem, size = 0x12000, scoped, tag = 'internal scratch']
  %s0 = inlined_call_operand.vmem [shape: f32[8,32], index: 0, kind: input, shape index: {}]
  %s1 = inlined_call_operand.vmem [shape: bf16[32,64], index: 1, kind: input, shape index: {}]
  %s2 = inlined_call_operand.vmem [shape: f32[1,64], index: 2, kind: input, shape index: {}]
  %s3 = inlined_call_operand.vmem [shape: bf16[64,64], index: 3, kind: input, shape index: {}]
  %s4 = inlined_call_operand.vmem [shape: f32[1,64], index: 4, kind: input, shape index: {}]
  %s5 = inlined_call_operand.vmem [shape: bf16[64,32], index: 5, kind: input, shape index: {}]
  %s6 = inlined_call_operand.vmem [shape: f32[1,32], index: 6, kind: input, shape index: {}]
  %s7 = inlined_call_operand.vmem [shape: bf16[32,16], index: 7, kind: input, shape index: {}]
  %s8 = inlined_call_operand.vmem [shape: f32[1,16], index: 8, kind: input, shape index: {}]
  %s9 = inlined_call_operand.hbm [shape: f32[8,16], index: 9, kind: output, shape index: {}]
  %s10 = sld [smem:[#allocation0]]
  $region46: #{ffnn_forward.1} parent=0
    _
  %s12 = ssub.s32 1, %s10
  %s13 = scalar_select 0, %s12, %s10
  $region1: #{ffnn_forward.1} parent=0
    #allocation2 [shape = 'u8[4096]{0}', space=vmem, size = 0x1000, scoped, tag = 'output window, operand 0, single buffered']
    #allocation3 [shape = 's32[1]{0}', space=sflag, size = 0x4, scoped, tag = 'scoped memory for ffnn_forward.1']
    %14 = vsyncpa [#allocation3], 0
    // Predicated region
    $region2: #{ffnn_forward.1} parent=1 // pred_check
      _
    $region3: #{ffnn_forward.1} parent=1 // pred_check_branch
      %16 = sbr.rel (0) target = $region5
    $region4: #{ffnn_forward.1} parent=1 // pred_region
      _
    $region5: #{ffnn_forward.1} parent=1 // pred_fallthru
      _
    // Predicated region
    $region6: #{ffnn_forward.1} parent=1 // pred_check
      _
    $region7: #{ffnn_forward.1} parent=1 // pred_check_branch
      %18 = sbr.rel (0) target = $region9
    $region8: #{ffnn_forward.1} parent=1 // pred_region
      _
    $region9: #{ffnn_forward.1} parent=1 // pred_fallthru
      _
    // Predicated region
    $region10: #{ffnn_forward.1} parent=1 // pred_check
      _
    $region11: #{ffnn_forward.1} parent=1 // pred_check_branch
      %20 = sbr.rel (0) target = $region13
    $region12: #{ffnn_forward.1} parent=1 // pred_region
      _
    $region13: #{ffnn_forward.1} parent=1 // pred_fallthru
      _
    // Predicated region
    $region14: #{ffnn_forward.1} parent=1 // pred_check
      _
    $region15: #{ffnn_forward.1} parent=1 // pred_check_branch
      %22 = sbr.rel (0) target = $region17
    $region16: #{ffnn_forward.1} parent=1 // pred_region
      _
    $region17: #{ffnn_forward.1} parent=1 // pred_fallthru
      _
    // Predicated region
    $region18: #{ffnn_forward.1} parent=1 // pred_check
      _
    $region19: #{ffnn_forward.1} parent=1 // pred_check_branch
      %24 = sbr.rel (0) target = $region21
    $region20: #{ffnn_forward.1} parent=1 // pred_region
      _
    $region21: #{ffnn_forward.1} parent=1 // pred_fallthru
      _
    // Predicated region
    $region22: #{ffnn_forward.1} parent=1 // pred_check
      _
    $region23: #{ffnn_forward.1} parent=1 // pred_check_branch
      %26 = sbr.rel (0) target = $region25
    $region24: #{ffnn_forward.1} parent=1 // pred_region
      _
    $region25: #{ffnn_forward.1} parent=1 // pred_fallthru
      _
    // Predicated region
    $region26: #{ffnn_forward.1} parent=1 // pred_check
      _
    $region27: #{ffnn_forward.1} parent=1 // pred_check_branch
      %28 = sbr.rel (0) target = $region29
    $region28: #{ffnn_forward.1} parent=1 // pred_region
      _
    $region29: #{ffnn_forward.1} parent=1 // pred_fallthru
      _
    // Predicated region
    $region30: #{ffnn_forward.1} parent=1 // pred_check
      _
    $region31: #{ffnn_forward.1} parent=1 // pred_check_branch
      %30 = sbr.rel (0) target = $region33
    $region32: #{ffnn_forward.1} parent=1 // pred_region
      _
    $region33: #{ffnn_forward.1} parent=1 // pred_fallthru
      _
    // Predicated region
    $region34: #{ffnn_forward.1} parent=1 // pred_check
      _
    $region35: #{ffnn_forward.1} parent=1 // pred_check_branch
      %32 = sbr.rel (0) target = $region37
    $region36: #{ffnn_forward.1} parent=1 // pred_region
      _
    $region37: #{ffnn_forward.1} parent=1 // pred_fallthru
      _
    %v34 = vld [vmem:[%s0] sm:$0xff]
    %v35 = vpack.c.bf16 %v34, %v34
    %v36 = vld [vmem:[%s1] sm:$0xf]
    %v37 = vld [vmem:[%s1 + $0x4] sm:$0xf]
    %v38 = vld [vmem:[%s1 + $0x8] sm:$0xf]
    %v39 = vld [vmem:[%s1 + $0xc] sm:$0xf]
    %v40 = vld [vmem:[%s2] sm:$0x1]
    %v42 = vlaneseq
    %v43 = vshrl.u32 %v42, 7
    %v44 = vsub.s32 0, %v43
    %v45 = vrot.slane %v40, %v44
    %v51 = vunpack.c.l.b16 %v36
    %v52 = vunpack.c.l.b16 %v37
    %v53 = vunpack.c.l.b16 %v38
    %v54 = vunpack.c.l.b16 %v39
    %v55 = vpack.c.b16 %v52, %v51
    %v56 = vpack.c.b16 %v54, %v53
    %vm59 = vcmask 261120
    %v61 = vsel %vm59, %v35, 0
    %63 = vmatprep.subr.bf16.mxu0 0
    %64 = vmatpush1.bf16.msra.mxu0 %v55
    %65 = vmatprep.subr.bf16.mxu0 0
    %66 = vmatpush1.bf16.msra.mxu0 %v56
    %67 = vmatprep.subr.bf16.mxu0 0
    %68 = vmatpush1.bf16.msra.mxu0 0
    %69 = vmatprep.subr.bf16.mxu0 0
    %70 = vmatpush1.bf16.msra.mxu0 0
    %71 = vmatprep.subr.bf16.mxu0 0
    %72 = vmatpush1.bf16.msra.mxu0 0
    %73 = vmatprep.subr.bf16.mxu0 0
    %74 = vmatpush1.bf16.msra.mxu0 0
    %75 = vmatprep.subr.bf16.mxu0 0
    %76 = vmatpush1.bf16.msra.mxu0 0
    %77 = vmatprep.subr.bf16.mxu0 0
    %78 = vmatpush1.bf16.msra.mxu0 0
    %79 = vmatprep.subr.bf16.mxu0 0
    %80 = vmatpush1.bf16.msra.mxu0 0
    %81 = vmatprep.subr.bf16.mxu0 0
    %82 = vmatpush1.bf16.msra.mxu0 0
    %83 = vmatprep.subr.bf16.mxu0 0
    %84 = vmatpush1.bf16.msra.mxu0 0
    %85 = vmatprep.subr.bf16.mxu0 0
    %86 = vmatpush1.bf16.msra.mxu0 0
    %87 = vmatprep.subr.bf16.mxu0 0
    %88 = vmatpush1.bf16.msra.mxu0 0
    %89 = vmatprep.subr.bf16.mxu0 0
    %90 = vmatpush1.bf16.msra.mxu0 0
    %91 = vmatprep.subr.bf16.mxu0 0
    %92 = vmatpush1.bf16.msra.mxu0 0
    %93 = vmatprep.subr.bf16.mxu0 0
    %94 = vmatpush1.bf16.msra.mxu0 0
    %95 = vmatprep.mubr.bf16.mxu0 0
    %96 = vmatmul.mubr.bf16.gmra.mrb[0].mxu0 %v61
    %v97 = vpop.f32.mrb[0].mxu0
    %v98 = vadd.f32 %v45, %v97
    %v99 = vpop.f32.mrb[0].mxu0
    %v100 = vpop.f32.mrb[0].mxu0
    %v101 = vpop.f32.mrb[0].mxu0
    %102 = vdwg.mxu0
    %v103 = vmax.f32 %v98, 0.0
    %v104 = vpack.c.bf16 %v103, %v103
    %v105 = vld [vmem:[%s3] sm:$0xf]
    %v106 = vld [vmem:[%s3 + $0x4] sm:$0xf]
    %v107 = vld [vmem:[%s3 + $0x8] sm:$0xf]
    %v108 = vld [vmem:[%s3 + $0xc] sm:$0xf]
    %v109 = vld [vmem:[%s3 + $0x10] sm:$0xf]
    %v110 = vld [vmem:[%s3 + $0x14] sm:$0xf]
    %v111 = vld [vmem:[%s3 + $0x18] sm:$0xf]
    %v112 = vld [vmem:[%s3 + $0x1c] sm:$0xf]
    %v113 = vld [vmem:[%s4] sm:$0x1]
    %v115 = vlaneseq
    %v116 = vshrl.u32 %v115, 7
    %v117 = vsub.s32 0, %v116
    %v118 = vrot.slane %v113, %v117
    %v128 = vunpack.c.l.b16 %v105
    %v129 = vunpack.c.l.b16 %v106
    %v130 = vunpack.c.l.b16 %v107
    %v131 = vunpack.c.l.b16 %v108
    %v132 = vunpack.c.l.b16 %v109
    %v133 = vunpack.c.l.b16 %v110
    %v134 = vunpack.c.l.b16 %v111
    %v135 = vunpack.c.l.b16 %v112
    %v136 = vpack.c.b16 %v129, %v128
    %v137 = vpack.c.b16 %v131, %v130
    %v138 = vpack.c.b16 %v133, %v132
    %v139 = vpack.c.b16 %v135, %v134
    %vm144 = vcmask 523264
    %v146 = vsel %vm144, %v104, 0
    %148 = vmatprep.subr.bf16.mxu0 0
    %149 = vmatpush1.bf16.msra.mxu0 %v136
    %150 = vmatprep.subr.bf16.mxu0 0
    %151 = vmatpush1.bf16.msra.mxu0 %v137
    %152 = vmatprep.subr.bf16.mxu0 0
    %153 = vmatpush1.bf16.msra.mxu0 %v138
    %154 = vmatprep.subr.bf16.mxu0 0
    %155 = vmatpush1.bf16.msra.mxu0 %v139
    %156 = vmatprep.subr.bf16.mxu0 0
    %157 = vmatpush1.bf16.msra.mxu0 0
    %158 = vmatprep.subr.bf16.mxu0 0
    %159 = vmatpush1.bf16.msra.mxu0 0
    %160 = vmatprep.subr.bf16.mxu0 0
    %161 = vmatpush1.bf16.msra.mxu0 0
    %162 = vmatprep.subr.bf16.mxu0 0
    %163 = vmatpush1.bf16.msra.mxu0 0
    %164 = vmatprep.subr.bf16.mxu0 0
    %165 = vmatpush1.bf16.msra.mxu0 0
    %166 = vmatprep.subr.bf16.mxu0 0
    %167 = vmatpush1.bf16.msra.mxu0 0
    %168 = vmatprep.subr.bf16.mxu0 0
    %169 = vmatpush1.bf16.msra.mxu0 0
    %170 = vmatprep.subr.bf16.mxu0 0
    %171 = vmatpush1.bf16.msra.mxu0 0
    %172 = vmatprep.subr.bf16.mxu0 0
    %173 = vmatpush1.bf16.msra.mxu0 0
    %174 = vmatprep.subr.bf16.mxu0 0
    %175 = vmatpush1.bf16.msra.mxu0 0
    %176 = vmatprep.subr.bf16.mxu0 0
    %177 = vmatpush1.bf16.msra.mxu0 0
    %178 = vmatprep.subr.bf16.mxu0 0
    %179 = vmatpush1.bf16.msra.mxu0 0
    %180 = vmatprep.mubr.bf16.mxu0 0
    %181 = vmatmul.mubr.bf16.gmra.mrb[0].mxu0 %v146
    %v182 = vpop.f32.mrb[0].mxu0
    %v183 = vadd.f32 %v118, %v182
    %v184 = vpop.f32.mrb[0].mxu0
    %v185 = vpop.f32.mrb[0].mxu0
    %v186 = vpop.f32.mrb[0].mxu0
    %187 = vdwg.mxu0
    %v188 = vmax.f32 %v183, 0.0
    %v189 = vpack.c.bf16 %v188, %v188
    %v190 = vld [vmem:[%s5] sm:$0xf]
    %v191 = vld [vmem:[%s5 + $0x4] sm:$0xf]
    %v192 = vld [vmem:[%s5 + $0x8] sm:$0xf]
    %v193 = vld [vmem:[%s5 + $0xc] sm:$0xf]
    %v194 = vld [vmem:[%s5 + $0x10] sm:$0xf]
    %v195 = vld [vmem:[%s5 + $0x14] sm:$0xf]
    %v196 = vld [vmem:[%s5 + $0x18] sm:$0xf]
    %v197 = vld [vmem:[%s5 + $0x1c] sm:$0xf]
    %v198 = vld [vmem:[%s6] sm:$0x1]
    %v200 = vlaneseq
    %v201 = vshrl.u32 %v200, 7
    %v202 = vsub.s32 0, %v201
    %v203 = vrot.slane %v198, %v202
    %v213 = vunpack.c.l.b16 %v190
    %v214 = vunpack.c.l.b16 %v191
    %v215 = vunpack.c.l.b16 %v192
    %v216 = vunpack.c.l.b16 %v193
    %v217 = vunpack.c.l.b16 %v194
    %v218 = vunpack.c.l.b16 %v195
    %v219 = vunpack.c.l.b16 %v196
    %v220 = vunpack.c.l.b16 %v197
    %v221 = vpack.c.b16 %v214, %v213
    %v222 = vpack.c.b16 %v216, %v215
    %v223 = vpack.c.b16 %v218, %v217
    %v224 = vpack.c.b16 %v220, %v219
    %v230 = vsel %vm144, %v189, 0
    %232 = vmatprep.subr.bf16.mxu0 0
    %233 = vmatpush1.bf16.msra.mxu0 %v221
    %234 = vmatprep.subr.bf16.mxu0 0
    %235 = vmatpush1.bf16.msra.mxu0 %v222
    %236 = vmatprep.subr.bf16.mxu0 0
    %237 = vmatpush1.bf16.msra.mxu0 %v223
    %238 = vmatprep.subr.bf16.mxu0 0
    %239 = vmatpush1.bf16.msra.mxu0 %v224
    %240 = vmatprep.subr.bf16.mxu0 0
    %241 = vmatpush1.bf16.msra.mxu0 0
    %242 = vmatprep.subr.bf16.mxu0 0
    %243 = vmatpush1.bf16.msra.mxu0 0
    %244 = vmatprep.subr.bf16.mxu0 0
    %245 = vmatpush1.bf16.msra.mxu0 0
    %246 = vmatprep.subr.bf16.mxu0 0
    %247 = vmatpush1.bf16.msra.mxu0 0
    %248 = vmatprep.subr.bf16.mxu0 0
    %249 = vmatpush1.bf16.msra.mxu0 0
    %250 = vmatprep.subr.bf16.mxu0 0
    %251 = vmatpush1.bf16.msra.mxu0 0
    %252 = vmatprep.subr.bf16.mxu0 0
    %253 = vmatpush1.bf16.msra.mxu0 0
    %254 = vmatprep.subr.bf16.mxu0 0
    %255 = vmatpush1.bf16.msra.mxu0 0
    %256 = vmatprep.subr.bf16.mxu0 0
    %257 = vmatpush1.bf16.msra.mxu0 0
    %258 = vmatprep.subr.bf16.mxu0 0
    %259 = vmatpush1.bf16.msra.mxu0 0
    %260 = vmatprep.subr.bf16.mxu0 0
    %261 = vmatpush1.bf16.msra.mxu0 0
    %262 = vmatprep.subr.bf16.mxu0 0
    %263 = vmatpush1.bf16.msra.mxu0 0
    %264 = vmatprep.mubr.bf16.mxu0 0
    %265 = vmatmul.mubr.bf16.gmra.mrb[0].mxu0 %v230
    %v266 = vpop.f32.mrb[0].mxu0
    %v267 = vadd.f32 %v203, %v266
    %v268 = vpop.f32.mrb[0].mxu0
    %v269 = vpop.f32.mrb[0].mxu0
    %v270 = vpop.f32.mrb[0].mxu0
    %271 = vdwg.mxu0
    %v272 = vmax.f32 %v267, 0.0
    %v273 = vpack.c.bf16 %v272, %v272
    %v274 = vld [vmem:[%s7] sm:$0xf]
    %v275 = vld [vmem:[%s7 + $0x4] sm:$0xf]
    %v276 = vld [vmem:[%s7 + $0x8] sm:$0xf]
    %v277 = vld [vmem:[%s7 + $0xc] sm:$0xf]
    %v278 = vld [vmem:[%s8] sm:$0x1]
    %v280 = vlaneseq
    %v281 = vshrl.u32 %v280, 7
    %v282 = vsub.s32 0, %v281
    %v283 = vrot.slane %v278, %v282
    %v289 = vunpack.c.l.b16 %v274
    %v290 = vunpack.c.l.b16 %v275
    %v291 = vunpack.c.l.b16 %v276
    %v292 = vunpack.c.l.b16 %v277
    %v293 = vpack.c.b16 %v290, %v289
    %v294 = vpack.c.b16 %v292, %v291
    %v298 = vsel %vm59, %v273, 0
    %300 = vmatprep.subr.bf16.mxu0 0
    %301 = vmatpush1.bf16.msra.mxu0 %v293
    %302 = vmatprep.subr.bf16.mxu0 0
    %303 = vmatpush1.bf16.msra.mxu0 %v294
    %304 = vmatprep.subr.bf16.mxu0 0
    %305 = vmatpush1.bf16.msra.mxu0 0
    %306 = vmatprep.subr.bf16.mxu0 0
    %307 = vmatpush1.bf16.msra.mxu0 0
    %308 = vmatprep.subr.bf16.mxu0 0
    %309 = vmatpush1.bf16.msra.mxu0 0
    %310 = vmatprep.subr.bf16.mxu0 0
    %311 = vmatpush1.bf16.msra.mxu0 0
    %312 = vmatprep.subr.bf16.mxu0 0
    %313 = vmatpush1.bf16.msra.mxu0 0
    %314 = vmatprep.subr.bf16.mxu0 0
    %315 = vmatpush1.bf16.msra.mxu0 0
    %316 = vmatprep.subr.bf16.mxu0 0
    %317 = vmatpush1.bf16.msra.mxu0 0
    %318 = vmatprep.subr.bf16.mxu0 0
    %319 = vmatpush1.bf16.msra.mxu0 0
    %320 = vmatprep.subr.bf16.mxu0 0
    %321 = vmatpush1.bf16.msra.mxu0 0
    %322 = vmatprep.subr.bf16.mxu0 0
    %323 = vmatpush1.bf16.msra.mxu0 0
    %324 = vmatprep.subr.bf16.mxu0 0
    %325 = vmatpush1.bf16.msra.mxu0 0
    %326 = vmatprep.subr.bf16.mxu0 0
    %327 = vmatpush1.bf16.msra.mxu0 0
    %328 = vmatprep.subr.bf16.mxu0 0
    %329 = vmatpush1.bf16.msra.mxu0 0
    %330 = vmatprep.subr.bf16.mxu0 0
    %331 = vmatpush1.bf16.msra.mxu0 0
    %332 = vmatprep.mubr.bf16.mxu0 0
    %333 = vmatmul.mubr.bf16.gmra.mrb[0].mxu0 %v298
    %v334 = vpop.f32.mrb[0].mxu0
    %v335 = vadd.f32 %v283, %v334
    %v336 = vpop.f32.mrb[0].mxu0
    %v337 = vpop.f32.mrb[0].mxu0
    %v338 = vpop.f32.mrb[0].mxu0
    %339 = vdwg.mxu0
    %vm340 = vcmask 130048
    %341 = vst.msk [vmem:[#allocation2] sm:$0xff] %vm340, %v335
    // Predicated region
    $region38: #{ffnn_forward.1} parent=1 // pred_check
      _
    $region39: #{ffnn_forward.1} parent=1 // pred_check_branch
      %343 = sbr.rel (0) target = $region41
    $region40: #{ffnn_forward.1} parent=1 // pred_region
      %s345 = ssub.s32 128, 128
      %346 = vsyncadd [#allocation3], %s345
      %s348 = sshll.u32 [#allocation2], 4
      %s349 = int_to_ptr.vmem [resolvable:$true] %s348
      %351 = dma.vmem_to_hbm [thread:$0]  %s349, 128, %s9, [#allocation3]
    $region41: #{ffnn_forward.1} parent=1 // pred_fallthru
      _
    // Predicated region
    $region42: #{ffnn_forward.1} parent=1 // pred_check
      _
    $region43: #{ffnn_forward.1} parent=1 // pred_check_branch
      %353 = sbr.rel (0) target = $region45
    $region44: #{ffnn_forward.1} parent=1 // pred_region
      %354 = dma.done [#allocation3], 128
    $region45: #{ffnn_forward.1} parent=1 // pred_fallthru
      _
    %355 = vsyncpa [#allocation3], 1

</llo_original>
